<compile_context>
chip_gen: v5e
topology: v5e:2x2
jax: 0.10.0
libtpu: 0.0.40
codegen_flags: <defaults>
</compile_context>

<pallas_src>
import jax
import jax.numpy as jnp
from jax import lax
from jax.experimental import pallas as pl
from jax.experimental.pallas import tpu as pltpu


# ----------------------------- Pallas kernel ------------------------------- #
def gcmc_kernel(
    x_ref,      # (Np, Dp) f32   node input features (all source nodes)
    cis_ref,    # (Np, 1)  f32   ci, source side (full)
    cid_ref,    # (TN, 1)  f32   ci, dst tile
    umask_ref,  # (TN, 1)  f32   1.0 for user rows, 0.0 for item rows
    b_ref,      # (1, TN, Ep) bf16  dst-tile x edge incidence for rating r
    s_ref,      # (1, Ep, Np) bf16  edge x src one-hot for rating r
    rf_ref,     # (1, Ep, Dp) bf16  review features pre-scaled by ci[src]
    wn_ref,     # (1, Np, Dp) f32   per-rating node embedding (GCMCGraphConv.weight)
    wrt_ref,    # (1, Dp, Dp) bf16  review_w weight, pre-transposed
    fcuw_ref,   # (Dp, Dp) f32   fc_user weight, pre-transposed
    fcub_ref,   # (1, Dp)  f32   fc_user bias
    fciw_ref,   # (Dp, Dp) f32   fc_item weight, pre-transposed
    fcib_ref,   # (1, Dp)  f32   fc_item bias
    out_ref,    # (TN, Dp) f32   output tile (also the cross-rating accumulator)
):
    # grid indices are read only at the top level of the kernel (never inside
    # a pl.when body) so the fallback/interpret lowering never sees a
    # program_id primitive inside a cond sub-jaxpr.
    r = pl.program_id(1)
    num_r = pl.num_programs(1)

    # --- per-rating source message: (x + W_r) * ci_src  (f32 VPU math) -------
    src_msg = ((x_ref[...] + wn_ref[0]) * cis_ref[...]).astype(jnp.bfloat16)

    # --- per-edge message (bf16 MXU operands, f32 accumulation) --------------
    # e1: gather of src_msg onto edges via the one-hot S (exact for 0/1 bf16)
    # e2: review_w(review_feat) * ci[src]   (rf was pre-scaled in the wrapper)
    e1 = jnp.dot(s_ref[0], src_msg, preferred_element_type=jnp.float32)   # (Ep, Dp)
    e2 = jnp.dot(rf_ref[0], wrt_ref[0], preferred_element_type=jnp.float32)
    edge_msg = (e1 + e2).astype(jnp.bfloat16)

    # --- scatter-add onto the dst tile via incidence B ------------------------
    h = jnp.dot(b_ref[0], edge_msg, preferred_element_type=jnp.float32)   # (TN, Dp)

    @pl.when(r == 0)
    def _():
        out_ref[...] = jnp.zeros_like(out_ref)

    # accumulate the HeteroGraphConv 'sum' over ratings directly in the output
    out_ref[...] += h

    # --- finalize once per dst tile: dst-side ci, then fc_user / fc_item ------
    @pl.when(r == num_r - 1)
    def _():
        feat = out_ref[...] * cid_ref[...]            # ci_dst applied once (hoisted)
        u = jnp.dot(feat, fcuw_ref[...], preferred_element_type=jnp.float32) + fcub_ref[...]
        v = jnp.dot(feat, fciw_ref[...], preferred_element_type=jnp.float32) + fcib_ref[...]
        m = umask_ref[...]                            # (TN, 1) in {0.0, 1.0}
        out_ref[...] = (u * m + v * (1.0 - m)).astype(out_ref.dtype)


# ------------------------------- wrapper ------------------------------------ #
def _round_up(v, m):
    return (v + m - 1) // m * m


def gcmc_layer(x, ci, src, B, S, rf, Wn, Wrev, fcu_w, fcu_b, fci_w, fci_b, *, num_user):
    """Builds padded / casted operands, BlockSpecs and grid; calls the kernel."""
    R, N, E = B.shape
    D = x.shape[1]

    f32, bf16 = jnp.float32, jnp.bfloat16

    # layout: lane-dense feature dim, sublane-aligned node/edge dims,
    # dst tiles of at most 512 rows (VMEM budget on v7x + megacore sharding).
    Dp = _round_up(D, 128)
    Ep = _round_up(E, 8)
    if N <= 512:
        Np = _round_up(N, 8)
        TN = Np
    else:
        TN = 512
        Np = _round_up(N, TN)

    def pad2(a, r0, r1):
        return jnp.pad(a, ((0, r0 - a.shape[0]), (0, r1 - a.shape[1])))

    def pad3(a, r1, r2):
        return jnp.pad(a, ((0, 0), (0, r1 - a.shape[1]), (0, r2 - a.shape[2])))

    # glue (plain JAX, outside the kernel):
    #  * pre-scale review features by ci[src] with an exact gather — removes the
    #    degenerate (E,N)x(N,1) matmul from the kernel.
    #  * pre-transpose linear weights, zero-pad, cast the MXU-operand streams to
    #    bf16 (incidence entries are 0/1 -> exact).
    #  * build the user/item row mask (replaces in-kernel program_id row math).
    ci_src_e = jnp.take(ci[:, 0], src, axis=0)[..., None]          # (R, E, 1)
    rf_sc = rf * ci_src_e

    x_p    = pad2(x, Np, Dp).astype(f32)
    ci_p   = pad2(ci, Np, 1).astype(f32)
    umask  = (jnp.arange(Np) < num_user).astype(f32).reshape(Np, 1)
    B_p    = pad3(B, Np, Ep).astype(bf16)
    S_p    = pad3(S, Ep, Np).astype(bf16)
    rfsc_p = pad3(rf_sc, Ep, Dp).astype(bf16)
    Wn_p   = pad3(Wn, Np, Dp).astype(f32)
    Wrt_p  = pad3(jnp.transpose(Wrev, (0, 2, 1)), Dp, Dp).astype(bf16)
    fcu_wt = pad2(fcu_w.T, Dp, Dp).astype(f32)
    fci_wt = pad2(fci_w.T, Dp, Dp).astype(f32)
    fcu_b2 = pad2(fcu_b.reshape(1, D), 1, Dp).astype(f32)
    fci_b2 = pad2(fci_b.reshape(1, D), 1, Dp).astype(f32)

    grid = (Np // TN, R)   # (dst tiles 'parallel', ratings 'arbitrary' reduction)

    grid_spec = pltpu.PrefetchScalarGridSpec(
        num_scalar_prefetch=0,
        grid=grid,
        in_specs=[
            # constant-index blocks (x, ci, mask, fc params) are fetched once and
            # stay resident; only the per-rating streams change block index with r.
            pl.BlockSpec((Np, Dp), lambda i, r: (0, 0)),        # x
            pl.BlockSpec((Np, 1), lambda i, r: (0, 0)),         # ci (src side)
            pl.BlockSpec((TN, 1), lambda i, r: (i, 0)),         # ci (dst tile)
            pl.BlockSpec((TN, 1), lambda i, r: (i, 0)),         # user-row mask (dst tile)
            pl.BlockSpec((1, TN, Ep), lambda i, r: (r, i, 0)),  # B  (dst x edge)
            pl.BlockSpec((1, Ep, Np), lambda i, r: (r, 0, 0)),  # S  (edge x src)
            pl.BlockSpec((1, Ep, Dp), lambda i, r: (r, 0, 0)),  # rf * ci[src]
            pl.BlockSpec((1, Np, Dp), lambda i, r: (r, 0, 0)),  # W_node
            pl.BlockSpec((1, Dp, Dp), lambda i, r: (r, 0, 0)),  # W_rev^T
            pl.BlockSpec((Dp, Dp), lambda i, r: (0, 0)),        # fc_user W^T
            pl.BlockSpec((1, Dp), lambda i, r: (0, 0)),         # fc_user b
            pl.BlockSpec((Dp, Dp), lambda i, r: (0, 0)),        # fc_item W^T
            pl.BlockSpec((1, Dp), lambda i, r: (0, 0)),         # fc_item b
        ],
        out_specs=pl.BlockSpec((TN, Dp), lambda i, r: (i, 0)),
    )

    out = pl.pallas_call(
        gcmc_kernel,
        out_shape=jax.ShapeDtypeStruct((Np, Dp), jnp.float32),
        grid_spec=grid_spec,
        compiler_params=pltpu.CompilerParams(
            dimension_semantics=("parallel", "arbitrary"),
            vmem_limit_bytes=32 * 1024 * 1024),
    )(x_p, ci_p, ci_p, umask, B_p, S_p, rfsc_p, Wn_p, Wrt_p,
      fcu_wt, fcu_b2, fci_wt, fci_b2)

    return out[:N, :D]


# ----------------------------- references (pure JAX) ------------------------ #
def gcmc_reference_f32(x, ci, src, dst, rf, Wn, Wrev, fcu_w, fcu_b, fci_w, fci_b,
                       num_user):
    """Literal f32 module semantics (gather/scatter message passing)."""
    N, D = x.shape
    R = Wn.shape[0]
    feat = jnp.zeros((N, D), jnp.float32)
    for r in range(R):
        msg = (x[src[r]] + Wn[r][src[r]] + rf[r] @ Wrev[r].T) * ci[src[r]]
        feat = feat + jnp.zeros((N, D), jnp.float32).at[dst[r]].add(msg)
    feat = feat * ci
    u = feat[:num_user] @ fcu_w.T + fcu_b
    i = feat[num_user:] @ fci_w.T + fci_b
    return jnp.concatenate([u, i], axis=0)


def gcmc_reference_mixed(x, ci, src, dst, rf, Wn, Wrev, fcu_w, fcu_b, fci_w, fci_b,
                         num_user):
    """Same gather/scatter semantics, but with the kernel's bf16 MXU-operand
    quantization points (f32 accumulation) — used for the tight check."""
    f32, bf16 = jnp.float32, jnp.bfloat16
    N, D = x.shape
    R = Wn.shape[0]
    feat = jnp.zeros((N, D), f32)
    for r in range(R):
        src_msg = ((x + Wn[r]) * ci).astype(bf16)
        ci_src = ci[src[r]]
        rf_sc = (rf[r] * ci_src).astype(bf16)
        e1 = src_msg[src[r]].astype(f32)
        e2 = jnp.dot(rf_sc, Wrev[r].T.astype(bf16), preferred_element_type=f32)
        msg = (e1 + e2).astype(bf16).astype(f32)
        feat = feat.at[dst[r]].add(msg)
    feat = feat * ci
    u = feat[:num_user] @ fcu_w.T + fcu_b
    i = feat[num_user:] @ fci_w.T + fci_b
    return jnp.concatenate([u, i], axis=0)


# ----------------------------- param / data setup --------------------------- #
def xavier_uniform(key, shape):
    fan_in, fan_out = shape[-1], shape[-2]
    bound = (6.0 / (fan_in + fan_out)) ** 0.5
    return jax.random.uniform(key, shape, jnp.float32, -bound, bound)


if __name__ == "__main__":
    # small, module-consistent shapes
    NUM_USER, NUM_ITEM = 8, 8
    N = NUM_USER + NUM_ITEM
    D = 32                      # msg_units == out_units (required by torch.cat)
    E = 16                      # edges per rating
    R = 2                       # rating_vals = [1, 2]

    key = jax.random.PRNGKey(0)
    keys = jax.random.split(key, 16)

    # node features and graph structure
    x = jax.random.normal(keys[0], (N, D), jnp.float32)
    src = jax.random.randint(keys[1], (R, E), 0, N)
    dst = jax.random.randint(keys[2], (R, E), 0, N)
    rf = jax.random.normal(keys[3], (R, E, D), jnp.float32)   # edata['review_feat']

    # ci normalization: 1/sqrt(1 + total degree), like GCMC
    deg = jnp.zeros((N,), jnp.float32)
    for r in range(R):
        deg = deg.at[src[r]].add(1.0).at[dst[r]].add(1.0)
    ci = (1.0 / jnp.sqrt(1.0 + deg)).reshape(N, 1)

    # dense incidence matrices (glue, plain JAX).  The dense (N,N) adjacency is
    # not needed: the kernel uses the B @ S factorization.
    B = jnp.stack([jnp.zeros((N, E), jnp.float32).at[dst[r], jnp.arange(E)].add(1.0)
                   for r in range(R)])
    S = jnp.stack([jax.nn.one_hot(src[r], N, dtype=jnp.float32) for r in range(R)])

    # parameters (deterministic xavier-uniform init; no checkpoint)
    Wn = jnp.stack([xavier_uniform(keys[4 + r], (N, D)) for r in range(R)])      # GCMCGraphConv.weight
    Wrev = jnp.stack([xavier_uniform(keys[6 + r], (D, D)) for r in range(R)])    # review_w.weight
    # TODO(synk): prob_score ('pa') and agg_act are created by the module but never
    # consumed in this forward path, so they are intentionally omitted.
    fcu_w = xavier_uniform(keys[8], (D, D))                                       # fc_user.weight
    fcu_b = jnp.zeros((D,), jnp.float32)                                          # fc_user.bias
    fci_w = xavier_uniform(keys[9], (D, D))                                       # fc_item.weight
    fci_b = jnp.zeros((D,), jnp.float32)                                          # fc_item.bias

    out = gcmc_layer(x, ci, src, B, S, rf, Wn, Wrev, fcu_w, fcu_b, fci_w, fci_b,
                     num_user=NUM_USER)
    out = jax.block_until_ready(out)
    assert out.shape == (N, D)

    # tight check: independent gather/scatter reference with matching bf16
    # MXU-operand quantization points
    ref_mixed = gcmc_reference_mixed(x, ci, src, dst, rf, Wn, Wrev,
                                     fcu_w, fcu_b, fci_w, fci_b, NUM_USER)
    assert jnp.allclose(out, ref_mixed, atol=1e-2, rtol=1e-2), "mismatch vs mixed reference"

    # sanity check vs the pure-f32 module semantics (bounds bf16 MXU error)
    ref_f32 = gcmc_reference_f32(x, ci, src, dst, rf, Wn, Wrev,
                                 fcu_w, fcu_b, fci_w, fci_b, NUM_USER)
    assert jnp.allclose(out, ref_f32, atol=1e-1, rtol=1e-1), "mismatch vs f32 reference"

    print("KERNEL_OK")
</pallas_src>

<mosaic_0001>
module attributes {stable_mosaic.version = 11 : i64} {
  func.func @gcmc_kernel(%arg0: i32, %arg1: i32, %arg2: memref<16x128xf32, #tpu.memory_space<vmem>>, %arg3: memref<16x1xf32, #tpu.memory_space<vmem>>, %arg4: memref<16x1xf32, #tpu.memory_space<vmem>>, %arg5: memref<16x1xf32, #tpu.memory_space<vmem>>, %arg6: memref<1x16x16xbf16, #tpu.memory_space<vmem>>, %arg7: memref<1x16x16xbf16, #tpu.memory_space<vmem>>, %arg8: memref<1x16x128xbf16, #tpu.memory_space<vmem>>, %arg9: memref<1x16x128xf32, #tpu.memory_space<vmem>>, %arg10: memref<1x128x128xbf16, #tpu.memory_space<vmem>>, %arg11: memref<128x128xf32, #tpu.memory_space<vmem>>, %arg12: memref<1x128xf32, #tpu.memory_space<vmem>>, %arg13: memref<128x128xf32, #tpu.memory_space<vmem>>, %arg14: memref<1x128xf32, #tpu.memory_space<vmem>>, %arg15: memref<16x128xf32, #tpu.memory_space<vmem>>) attributes {dimension_semantics = [#tpu.dimension_semantics<parallel>, #tpu.dimension_semantics<arbitrary>], iteration_bounds = array<i64: 1, 2>, scalar_prefetch = 0 : i64, scratch_operands = 0 : i64, tpu.core_type = #tpu.core_type<tc>, window_params = [{pipeline_mode = #tpu.pipeline_mode<synchronous>, transform_indices = @transform_0, window_bounds = array<i64: 16, 128>}, {pipeline_mode = #tpu.pipeline_mode<synchronous>, transform_indices = @transform_1, window_bounds = array<i64: 16, 1>}, {transform_indices = @transform_2, window_bounds = array<i64: 16, 1>}, {transform_indices = @transform_3, window_bounds = array<i64: 16, 1>}, {transform_indices = @transform_4, window_bounds = array<i64: 1, 16, 16>}, {transform_indices = @transform_5, window_bounds = array<i64: 1, 16, 16>}, {transform_indices = @transform_6, window_bounds = array<i64: 1, 16, 128>}, {transform_indices = @transform_7, window_bounds = array<i64: 1, 16, 128>}, {transform_indices = @transform_8, window_bounds = array<i64: 1, 128, 128>}, {pipeline_mode = #tpu.pipeline_mode<synchronous>, transform_indices = @transform_9, window_bounds = array<i64: 128, 128>}, {pipeline_mode = #tpu.pipeline_mode<synchronous>, transform_indices = @transform_10, window_bounds = array<i64: 1, 128>}, {pipeline_mode = #tpu.pipeline_mode<synchronous>, transform_indices = @transform_11, window_bounds = array<i64: 128, 128>}, {pipeline_mode = #tpu.pipeline_mode<synchronous>, transform_indices = @transform_12, window_bounds = array<i64: 1, 128>}, {transform_indices = @transform_13, window_bounds = array<i64: 16, 128>}]} {
    %c0 = arith.constant 0 : index
    %c0_0 = arith.constant 0 : index
    %0 = vector.load %arg2[%c0, %c0_0] : memref<16x128xf32, #tpu.memory_space<vmem>>, vector<16x128xf32>
    %c0_1 = arith.constant 0 : index
    %c0_2 = arith.constant 0 : index
    %c0_3 = arith.constant 0 : index
    %1 = vector.load %arg9[%c0_1, %c0_2, %c0_3] : memref<1x16x128xf32, #tpu.memory_space<vmem>>, vector<1x16x128xf32>
    %2 = vector.shape_cast %1 : vector<1x16x128xf32> to vector<16x128xf32>
    %3 = arith.addf %0, %2 : vector<16x128xf32>
    %c0_4 = arith.constant 0 : index
    %c0_5 = arith.constant 0 : index
    %4 = vector.load %arg3[%c0_4, %c0_5] : memref<16x1xf32, #tpu.memory_space<vmem>>, vector<16x1xf32>
    %5 = vector.broadcast %4 : vector<16x1xf32> to vector<16x128xf32>
    %6 = arith.mulf %3, %5 : vector<16x128xf32>
    %7 = arith.truncf %6 : vector<16x128xf32> to vector<16x128xbf16>
    %c0_6 = arith.constant 0 : index
    %c0_7 = arith.constant 0 : index
    %c0_8 = arith.constant 0 : index
    %8 = vector.load %arg7[%c0_6, %c0_7, %c0_8] : memref<1x16x16xbf16, #tpu.memory_space<vmem>>, vector<1x16x16xbf16>
    %9 = vector.shape_cast %8 : vector<1x16x16xbf16> to vector<16x16xbf16>
    %cst = arith.constant dense<0.000000e+00> : vector<16x128xf32>
    %10 = tpu.matmul %9, %7, %cst {dimension_numbers = #tpu.dot_dimension_numbers<[1], [0], [0], [1], [0, 0, 1, 1], [], []>} : vector<16x16xbf16>, vector<16x128xbf16>, vector<16x128xf32> -> vector<16x128xf32>
    %c0_9 = arith.constant 0 : index
    %c0_10 = arith.constant 0 : index
    %c0_11 = arith.constant 0 : index
    %11 = vector.load %arg8[%c0_9, %c0_10, %c0_11] : memref<1x16x128xbf16, #tpu.memory_space<vmem>>, vector<1x16x128xbf16>
    %12 = vector.shape_cast %11 : vector<1x16x128xbf16> to vector<16x128xbf16>
    %c0_12 = arith.constant 0 : index
    %c0_13 = arith.constant 0 : index
    %c0_14 = arith.constant 0 : index
    %13 = vector.load %arg10[%c0_12, %c0_13, %c0_14] : memref<1x128x128xbf16, #tpu.memory_space<vmem>>, vector<1x128x128xbf16>
    %14 = vector.shape_cast %13 : vector<1x128x128xbf16> to vector<128x128xbf16>
    %cst_15 = arith.constant dense<0.000000e+00> : vector<16x128xf32>
    %15 = tpu.matmul %12, %14, %cst_15 {dimension_numbers = #tpu.dot_dimension_numbers<[1], [0], [0], [1], [0, 0, 1, 1], [], []>} : vector<16x128xbf16>, vector<128x128xbf16>, vector<16x128xf32> -> vector<16x128xf32>
    %16 = arith.addf %10, %15 : vector<16x128xf32>
    %17 = arith.truncf %16 : vector<16x128xf32> to vector<16x128xbf16>
    %c0_16 = arith.constant 0 : index
    %c0_17 = arith.constant 0 : index
    %c0_18 = arith.constant 0 : index
    %18 = vector.load %arg6[%c0_16, %c0_17, %c0_18] : memref<1x16x16xbf16, #tpu.memory_space<vmem>>, vector<1x16x16xbf16>
    %19 = vector.shape_cast %18 : vector<1x16x16xbf16> to vector<16x16xbf16>
    %cst_19 = arith.constant dense<0.000000e+00> : vector<16x128xf32>
    %20 = tpu.matmul %19, %17, %cst_19 {dimension_numbers = #tpu.dot_dimension_numbers<[1], [0], [0], [1], [0, 0, 1, 1], [], []>} : vector<16x16xbf16>, vector<16x128xbf16>, vector<16x128xf32> -> vector<16x128xf32>
    %c0_i32 = arith.constant 0 : i32
    %21 = arith.cmpi eq, %arg1, %c0_i32 : i32
    %22 = arith.extui %21 : i1 to i32
    %c0_i32_20 = arith.constant 0 : i32
    %23 = arith.cmpi ne, %22, %c0_i32_20 : i32
    scf.if %23 {
      %cst_26 = arith.constant 0.000000e+00 : f32
      %30 = vector.broadcast %cst_26 : f32 to vector<16x128xf32>
      %c0_27 = arith.constant 0 : index
      %c0_28 = arith.constant 0 : index
      %31 = vector.load %arg15[%c0_27, %c0_28] : memref<16x128xf32, #tpu.memory_space<vmem>>, vector<16x128xf32>
      tpu.vector_store %arg15[%c0_27, %c0_28], %30 {strides = array<i32>} : memref<16x128xf32, #tpu.memory_space<vmem>>, vector<16x128xf32>,
    } else {
    }
    %c0_21 = arith.constant 0 : index
    %c0_22 = arith.constant 0 : index
    %24 = vector.load %arg15[%c0_21, %c0_22] : memref<16x128xf32, #tpu.memory_space<vmem>>, vector<16x128xf32>
    %25 = arith.addf %24, %20 : vector<16x128xf32>
    %c0_23 = arith.constant 0 : index
    %c0_24 = arith.constant 0 : index
    %26 = vector.load %arg15[%c0_23, %c0_24] : memref<16x128xf32, #tpu.memory_space<vmem>>, vector<16x128xf32>
    tpu.vector_store %arg15[%c0_23, %c0_24], %25 {strides = array<i32>} : memref<16x128xf32, #tpu.memory_space<vmem>>, vector<16x128xf32>,
    %c1_i32 = arith.constant 1 : i32
    %27 = arith.cmpi eq, %arg1, %c1_i32 : i32
    %28 = arith.extui %27 : i1 to i32
    %c0_i32_25 = arith.constant 0 : i32
    %29 = arith.cmpi ne, %28, %c0_i32_25 : i32
    scf.if %29 {
      %c0_26 = arith.constant 0 : index
      %c0_27 = arith.constant 0 : index
      %30 = vector.load %arg15[%c0_26, %c0_27] : memref<16x128xf32, #tpu.memory_space<vmem>>, vector<16x128xf32>
      %c0_28 = arith.constant 0 : index
      %c0_29 = arith.constant 0 : index
      %31 = vector.load %arg4[%c0_28, %c0_29] : memref<16x1xf32, #tpu.memory_space<vmem>>, vector<16x1xf32>
      %32 = vector.broadcast %31 : vector<16x1xf32> to vector<16x128xf32>
      %33 = arith.mulf %30, %32 : vector<16x128xf32>
      %c0_30 = arith.constant 0 : index
      %c0_31 = arith.constant 0 : index
      %34 = vector.load %arg11[%c0_30, %c0_31] : memref<128x128xf32, #tpu.memory_space<vmem>>, vector<128x128xf32>
      %cst_32 = arith.constant dense<0.000000e+00> : vector<16x128xf32>
      %35 = tpu.matmul %33, %34, %cst_32 {dimension_numbers = #tpu.dot_dimension_numbers<[1], [0], [0], [1], [0, 0, 1, 1], [], []>} : vector<16x128xf32>, vector<128x128xf32>, vector<16x128xf32> -> vector<16x128xf32>
      %c0_33 = arith.constant 0 : index
      %c0_34 = arith.constant 0 : index
      %36 = vector.load %arg12[%c0_33, %c0_34] : memref<1x128xf32, #tpu.memory_space<vmem>>, vector<1x128xf32>
      %37 = vector.broadcast %36 : vector<1x128xf32> to vector<16x128xf32>
      %38 = arith.addf %35, %37 : vector<16x128xf32>
      %c0_35 = arith.constant 0 : index
      %c0_36 = arith.constant 0 : index
      %39 = vector.load %arg13[%c0_35, %c0_36] : memref<128x128xf32, #tpu.memory_space<vmem>>, vector<128x128xf32>
      %cst_37 = arith.constant dense<0.000000e+00> : vector<16x128xf32>
      %40 = tpu.matmul %33, %39, %cst_37 {dimension_numbers = #tpu.dot_dimension_numbers<[1], [0], [0], [1], [0, 0, 1, 1], [], []>} : vector<16x128xf32>, vector<128x128xf32>, vector<16x128xf32> -> vector<16x128xf32>
      %c0_38 = arith.constant 0 : index
      %c0_39 = arith.constant 0 : index
      %41 = vector.load %arg14[%c0_38, %c0_39] : memref<1x128xf32, #tpu.memory_space<vmem>>, vector<1x128xf32>
      %42 = vector.broadcast %41 : vector<1x128xf32> to vector<16x128xf32>
      %43 = arith.addf %40, %42 : vector<16x128xf32>
      %c0_40 = arith.constant 0 : index
      %c0_41 = arith.constant 0 : index
      %44 = vector.load %arg5[%c0_40, %c0_41] : memref<16x1xf32, #tpu.memory_space<vmem>>, vector<16x1xf32>
      %45 = vector.broadcast %44 : vector<16x1xf32> to vector<16x128xf32>
      %46 = arith.mulf %38, %45 : vector<16x128xf32>
      %cst_42 = arith.constant 1.000000e+00 : f32
      %47 = vector.broadcast %cst_42 : f32 to vector<16x1xf32>
      %48 = arith.subf %47, %44 : vector<16x1xf32>
      %49 = vector.broadcast %48 : vector<16x1xf32> to vector<16x128xf32>
      %50 = arith.mulf %43, %49 : vector<16x128xf32>
      %51 = arith.addf %46, %50 : vector<16x128xf32>
      %c0_43 = arith.constant 0 : index
      %c0_44 = arith.constant 0 : index
      %52 = vector.load %arg15[%c0_43, %c0_44] : memref<16x128xf32, #tpu.memory_space<vmem>>, vector<16x128xf32>
      tpu.vector_store %arg15[%c0_43, %c0_44], %51 {strides = array<i32>} : memref<16x128xf32, #tpu.memory_space<vmem>>, vector<16x128xf32>,
    } else {
    }
    return
  }
  func.func @transform_0(%arg0: i32, %arg1: i32) -> (i32, i32) {
    %c0_i32 = arith.constant 0 : i32
    %c0_i32_0 = arith.constant 0 : i32
    %c0_i32_1 = arith.constant 0 : i32
    return %c0_i32, %c0_i32_0 : i32, i32
  }
  func.func @transform_1(%arg0: i32, %arg1: i32) -> (i32, i32) {
    %c0_i32 = arith.constant 0 : i32
    %c0_i32_0 = arith.constant 0 : i32
    %c0_i32_1 = arith.constant 0 : i32
    return %c0_i32, %c0_i32_0 : i32, i32
  }
  func.func @transform_2(%arg0: i32, %arg1: i32) -> (i32, i32) {
    %c0_i32 = arith.constant 0 : i32
    %c0_i32_0 = arith.constant 0 : i32
    return %arg0, %c0_i32 : i32, i32
  }
  func.func @transform_3(%arg0: i32, %arg1: i32) -> (i32, i32) {
    %c0_i32 = arith.constant 0 : i32
    %c0_i32_0 = arith.constant 0 : i32
    return %arg0, %c0_i32 : i32, i32
  }
  func.func @transform_4(%arg0: i32, %arg1: i32) -> (i32, i32, i32) {
    %c0_i32 = arith.constant 0 : i32
    %c0_i32_0 = arith.constant 0 : i32
    return %arg1, %arg0, %c0_i32 : i32, i32, i32
  }
  func.func @transform_5(%arg0: i32, %arg1: i32) -> (i32, i32, i32) {
    %c0_i32 = arith.constant 0 : i32
    %c0_i32_0 = arith.constant 0 : i32
    %c0_i32_1 = arith.constant 0 : i32
    return %arg1, %c0_i32, %c0_i32_0 : i32, i32, i32
  }
  func.func @transform_6(%arg0: i32, %arg1: i32) -> (i32, i32, i32) {
    %c0_i32 = arith.constant 0 : i32
    %c0_i32_0 = arith.constant 0 : i32
    %c0_i32_1 = arith.constant 0 : i32
    return %arg1, %c0_i32, %c0_i32_0 : i32, i32, i32
  }
  func.func @transform_7(%arg0: i32, %arg1: i32) -> (i32, i32, i32) {
    %c0_i32 = arith.constant 0 : i32
    %c0_i32_0 = arith.constant 0 : i32
    %c0_i32_1 = arith.constant 0 : i32
    return %arg1, %c0_i32, %c0_i32_0 : i32, i32, i32
  }
  func.func @transform_8(%arg0: i32, %arg1: i32) -> (i32, i32, i32) {
    %c0_i32 = arith.constant 0 : i32
    %c0_i32_0 = arith.constant 0 : i32
    %c0_i32_1 = arith.constant 0 : i32
    return %arg1, %c0_i32, %c0_i32_0 : i32, i32, i32
  }
  func.func @transform_9(%arg0: i32, %arg1: i32) -> (i32, i32) {
    %c0_i32 = arith.constant 0 : i32
    %c0_i32_0 = arith.constant 0 : i32
    %c0_i32_1 = arith.constant 0 : i32
    return %c0_i32, %c0_i32_0 : i32, i32
  }
  func.func @transform_10(%arg0: i32, %arg1: i32) -> (i32, i32) {
    %c0_i32 = arith.constant 0 : i32
    %c0_i32_0 = arith.constant 0 : i32
    %c0_i32_1 = arith.constant 0 : i32
    return %c0_i32, %c0_i32_0 : i32, i32
  }
  func.func @transform_11(%arg0: i32, %arg1: i32) -> (i32, i32) {
    %c0_i32 = arith.constant 0 : i32
    %c0_i32_0 = arith.constant 0 : i32
    %c0_i32_1 = arith.constant 0 : i32
    return %c0_i32, %c0_i32_0 : i32, i32
  }
  func.func @transform_12(%arg0: i32, %arg1: i32) -> (i32, i32) {
    %c0_i32 = arith.constant 0 : i32
    %c0_i32_0 = arith.constant 0 : i32
    %c0_i32_1 = arith.constant 0 : i32
    return %c0_i32, %c0_i32_0 : i32, i32
  }
  func.func @transform_13(%arg0: i32, %arg1: i32) -> (i32, i32) {
    %c0_i32 = arith.constant 0 : i32
    %c0_i32_0 = arith.constant 0 : i32
    return %arg0, %c0_i32 : i32, i32
  }
}

</mosaic_0001>

<llo_original>
// kernel: tpu_custom_call.1
$region0: #{tpu_custom_call.1}
  #allocation0 [shape = 'u32[]', space=smem, size = 0x4, offset = 0x4, fixed_abs, tag = 'smem constant byte address 0x4 - core index']
  #allocation1 [shape = 'u32[72,128]{1,0:T(1,128)}', space=vmem, size = 0x9000, scoped, tag = 'internal scratch']
  %s0 = inlined_call_operand.vmem [shape: f32[16,128], index: 0, kind: input, shape index: {}]
  %s1 = inlined_call_operand.vmem [shape: f32[16,1], index: 1, kind: input, shape index: {}]
  %s2 = inlined_call_operand.vmem [shape: f32[16,1], index: 2, kind: input, shape index: {}]
  %s3 = inlined_call_operand.vmem [shape: f32[16,1], index: 3, kind: input, shape index: {}]
  %s4 = inlined_call_operand.hbm [shape: bf16[2,16,16], index: 4, kind: input, shape index: {}]
  %s5 = inlined_call_operand.hbm [shape: bf16[2,16,16], index: 5, kind: input, shape index: {}]
  %s6 = inlined_call_operand.hbm [shape: bf16[2,16,128], index: 6, kind: input, shape index: {}]
  %s7 = inlined_call_operand.vmem [shape: f32[2,16,128], index: 7, kind: input, shape index: {}]
  %s8 = inlined_call_operand.hbm [shape: bf16[2,128,128], index: 8, kind: input, shape index: {}]
  %s9 = inlined_call_operand.hbm [shape: f32[128,128], index: 9, kind: input, shape index: {}]
  %s10 = inlined_call_operand.vmem [shape: f32[1,128], index: 10, kind: input, shape index: {}]
  %s11 = inlined_call_operand.hbm [shape: f32[128,128], index: 11, kind: input, shape index: {}]
  %s12 = inlined_call_operand.vmem [shape: f32[1,128], index: 12, kind: input, shape index: {}]
  %s13 = inlined_call_operand.hbm [shape: f32[16,128], index: 13, kind: output, shape index: {}]
  %s14 = sld [smem:[#allocation0]]
  $region117: #{tpu_custom_call.1} parent=0
    _
  %s16 = ssub.s32 1, %s14
  %s17 = scalar_select 0, %s16, %s14
  $region1: #{tpu_custom_call.1} parent=0
    #allocation2 [shape = 'u8[8192]{0}', space=vmem, size = 0x2000, scoped, tag = 'input window, operand 4']
    #allocation3 [shape = 's32[2]{0}', space=sflag, size = 0x8, scoped, tag = 'scoped memory for tpu_custom_call.1']
    #allocation4 [shape = 's32[2]{0}', space=sflag, size = 0x8, scoped, tag = 'scoped memory for tpu_custom_call.1']
    #allocation5 [shape = 'u8[8192]{0}', space=vmem, size = 0x2000, scoped, tag = 'input window, operand 5']
    #allocation6 [shape = 's32[2]{0}', space=sflag, size = 0x8, scoped, tag = 'scoped memory for tpu_custom_call.1']
    #allocation7 [shape = 'u8[8192]{0}', space=vmem, size = 0x2000, scoped, tag = 'input window, operand 6']
    #allocation8 [shape = 'u8[65536]{0}', space=vmem, size = 0x10000, scoped, tag = 'input window, operand 8']
    #allocation9 [shape = 's32[2]{0}', space=sflag, size = 0x8, scoped, tag = 'scoped memory for tpu_custom_call.1']
    #allocation10 [shape = 'u8[65536]{0}', space=vmem, size = 0x10000, scoped, tag = 'input window, operand 9, single buffered']
    #allocation11 [shape = 'u8[65536]{0}', space=vmem, size = 0x10000, scoped, tag = 'input window, operand 11, single buffered']
    #allocation12 [shape = 's32[1]{0}', space=sflag, size = 0x4, scoped, tag = 'scoped memory for tpu_custom_call.1']
    #allocation13 [shape = 'u8[8192]{0}', space=vmem, size = 0x2000, scoped, tag = 'output window, operand 0, single buffered']
    %18 = vsyncpa [#allocation3], 0
    %s19 = scalar_lea.sflag [#allocation3], 1
    %20 = vsyncpa %s19, 0
    %21 = vsyncpa [#allocation6], 0
    %s22 = scalar_lea.sflag [#allocation6], 1
    %23 = vsyncpa %s22, 0
    %24 = vsyncpa [#allocation9], 0
    %s25 = scalar_lea.sflag [#allocation9], 1
    %26 = vsyncpa %s25, 0
    %27 = vsyncpa [#allocation12], 0
    %28 = vsyncpa [#allocation4], 0
    loop: start=0, step=1, limit=4
    $region2: #{tpu_custom_call.1} parent=1 // loop_pre_header
      _
    $region3: #{tpu_custom_call.1} parent=1 // loop_header
      %s30 = sphi 0, %s34
      %p31 = scmp.ge.s32.totalorder %s30, 4
      %s37 = sphi 0, %s49
      %s38 = sphi 0, %s45
      %s39 = sphi 0, %s37
      %s40 = sphi 0, %s38
      %s41 = sphi 0, %s39
      %s42 = sphi 0, %s40
      %s50 = sphi 0, %s50
      %s52 = sphi 0, %s50
      %s53 = sphi 0, %s52
      %s67 = sphi 0, %s53
      %s71 = sphi 0, %s71
      %s73 = sphi 0, %s71
      %s74 = sphi 0, %s73
      %s88 = sphi 0, %s74
      %s94 = sphi 0, %s96
      %s97 = sphi 0, %s94
      %s98 = sphi 0, %s97
      %s114 = sphi 0, %s98
      %s120 = sphi 0, %s122
      %s123 = sphi 0, %s120
      %s124 = sphi 0, %s123
      %s140 = sphi 0, %s124
      %s148 = sphi 0, %s150
      %s151 = sphi 0, %s148
      %s152 = sphi 0, %s151
      %s168 = sphi 0, %s152
      %s174 = sphi 0, %s176
      %s177 = sphi 0, %s174
      %s178 = sphi 0, %s177
      %s194 = sphi 0, %s178
      %s200 = sphi 0, %s202
      %s203 = sphi 0, %s200
      %s204 = sphi 0, %s203
      %s220 = sphi 0, %s204
      %s226 = sphi 0, %s228
      %s229 = sphi 0, %s226
      %s230 = sphi 0, %s229
      %s246 = sphi 0, %s230
      %s252 = sphi 0, %s254
      %s255 = sphi 0, %s252
      %s256 = sphi 0, %s255
      %s272 = sphi 0, %s256
      %s276 = sphi 0, %s276
      %s278 = sphi 0, %s276
      %s279 = sphi 0, %s278
      %s293 = sphi 0, %s279
      %s297 = sphi 0, %s297
      %s299 = sphi 0, %s297
      %s300 = sphi 0, %s299
      %s314 = sphi 0, %s300
      %s318 = sphi 0, %s318
      %s320 = sphi 0, %s318
      %s321 = sphi 0, %s320
      %s335 = sphi 0, %s321
      %s339 = sphi 0, %s339
      %s341 = sphi 0, %s339
      %s342 = sphi 0, %s341
      %s356 = sphi 0, %s342
      %s362 = sphi 0, %s364
      %s365 = sphi 0, %s362
      %s366 = sphi 0, %s365
      %s382 = sphi 0, %s366
    $region4: #{tpu_custom_call.1} parent=1 // loop_header_branch
      %33 = sbr.rel (%p31) target = $region8
    $region5: #{tpu_custom_call.1} parent=1 // loop_body
      %s35 = ssub.s32 %s30, 1
      %s36 = ssub.s32 %s30, 2
      %s43 = sadd.s32 1, %s38
      %p44 = scmp.ge.s32.totalorder %s43, 2
      %s45 = scalar_select %p44, 0, %s43
      %s46 = sadd.s32 1, %s37
      %s47 = scalar_select %p44, %s46, %s37
      %p48 = scmp.ge.s32.totalorder %s47, 1
      %s49 = scalar_select %p48, 0, %s47
      %s51 = sadd.s32 %s50, 1
      %p54 = scmp.eq.s32.totalorder %s30, 1
      %p55 = scmp.ne.s32.totalorder %s50, %s52
      %p56 = scmp.eq.s32.totalorder %s30, 0
      %p57 = por %p55, %p56
      %p58 = scmp.ne.s32.totalorder %s50, %s52
      %p59 = scmp.eq.s32.totalorder %s35, 1
      %p60 = por %p58, %p59
      %p61 = scmp.ne.s32.totalorder %s52, %s53
      %p62 = scmp.eq.s32.totalorder %s35, 0
      %p63 = por %p61, %p62
      %p64 = scmp.ne.s32.totalorder %s52, %s53
      %p65 = scmp.eq.s32.totalorder %s36, 1
      %p66 = por %p64, %p65
      %p68 = scmp.ne.s32.totalorder %s53, %s67
      %p69 = scmp.eq.s32.totalorder %s36, 0
      %p70 = por %p68, %p69
      %s72 = sadd.s32 %s71, 1
      %p75 = scmp.eq.s32.totalorder %s30, 1
      %p76 = scmp.ne.s32.totalorder %s71, %s73
      %p77 = scmp.eq.s32.totalorder %s30, 0
      %p78 = por %p76, %p77
      %p79 = scmp.ne.s32.totalorder %s71, %s73
      %p80 = scmp.eq.s32.totalorder %s35, 1
      %p81 = por %p79, %p80
      %p82 = scmp.ne.s32.totalorder %s73, %s74
      %p83 = scmp.eq.s32.totalorder %s35, 0
      %p84 = por %p82, %p83
      %p85 = scmp.ne.s32.totalorder %s73, %s74
      %p86 = scmp.eq.s32.totalorder %s36, 1
      %p87 = por %p85, %p86
      %p89 = scmp.ne.s32.totalorder %s74, %s88
      %p90 = scmp.eq.s32.totalorder %s36, 0
      %p91 = por %p89, %p90
      %s92 = ssub.s32 %s37, %s49
      %p93 = scmp.eq.s32.totalorder %s92, 0
      %s95 = sadd.s32 %s94, 1
      %s96 = scalar_select %p93, %s94, %s95
      %p99 = pneg %p93
      %p100 = scmp.eq.s32.totalorder %s30, 1
      %p101 = por %p99, %p100
      %p102 = scmp.ne.s32.totalorder %s94, %s97
      %p103 = scmp.eq.s32.totalorder %s30, 0
      %p104 = por %p102, %p103
      %p105 = scmp.ne.s32.totalorder %s94, %s97
      %p106 = scmp.eq.s32.totalorder %s35, 1
      %p107 = por %p105, %p106
      %p108 = scmp.ne.s32.totalorder %s97, %s98
      %p109 = scmp.eq.s32.totalorder %s35, 0
      %p110 = por %p108, %p109
      %p111 = scmp.ne.s32.totalorder %s97, %s98
      %p112 = scmp.eq.s32.totalorder %s36, 1
      %p113 = por %p111, %p112
      %p115 = scmp.ne.s32.totalorder %s98, %s114
      %p116 = scmp.eq.s32.totalorder %s36, 0
      %p117 = por %p115, %p116
      %s118 = ssub.s32 %s37, %s49
      %p119 = scmp.eq.s32.totalorder %s118, 0
      %s121 = sadd.s32 %s120, 1
      %s122 = scalar_select %p119, %s120, %s121
      %p125 = pneg %p119
      %p126 = scmp.eq.s32.totalorder %s30, 1
      %p127 = por %p125, %p126
      %p128 = scmp.ne.s32.totalorder %s120, %s123
      %p129 = scmp.eq.s32.totalorder %s30, 0
      %p130 = por %p128, %p129
      %p131 = scmp.ne.s32.totalorder %s120, %s123
      %p132 = scmp.eq.s32.totalorder %s35, 1
      %p133 = por %p131, %p132
      %p134 = scmp.ne.s32.totalorder %s123, %s124
      %p135 = scmp.eq.s32.totalorder %s35, 0
      %p136 = por %p134, %p135
      %p137 = scmp.ne.s32.totalorder %s123, %s124
      %p138 = scmp.eq.s32.totalorder %s36, 1
      %p139 = por %p137, %p138
      %p141 = scmp.ne.s32.totalorder %s124, %s140
      %p142 = scmp.eq.s32.totalorder %s36, 0
      %p143 = por %p141, %p142
      %s144 = ssub.s32 %s38, %s45
      %s145 = ssub.s32 %s37, %s49
      %s146 = sor.u32 %s144, %s145
      %p147 = scmp.eq.s32.totalorder %s146, 0
      %s149 = sadd.s32 %s148, 1
      %s150 = scalar_select %p147, %s148, %s149
      %p153 = pneg %p147
      %p154 = scmp.eq.s32.totalorder %s30, 1
      %p155 = por %p153, %p154
      %p156 = scmp.ne.s32.totalorder %s148, %s151
      %p157 = scmp.eq.s32.totalorder %s30, 0
      %p158 = por %p156, %p157
      %p159 = scmp.ne.s32.totalorder %s148, %s151
      %p160 = scmp.eq.s32.totalorder %s35, 1
      %p161 = por %p159, %p160
      %p162 = scmp.ne.s32.totalorder %s151, %s152
      %p163 = scmp.eq.s32.totalorder %s35, 0
      %p164 = por %p162, %p163
      %p165 = scmp.ne.s32.totalorder %s151, %s152
      %p166 = scmp.eq.s32.totalorder %s36, 1
      %p167 = por %p165, %p166
      %p169 = scmp.ne.s32.totalorder %s152, %s168
      %p170 = scmp.eq.s32.totalorder %s36, 0
      %p171 = por %p169, %p170
      %s172 = ssub.s32 %s38, %s45
      %p173 = scmp.eq.s32.totalorder %s172, 0
      %s175 = sadd.s32 %s174, 1
      %s176 = scalar_select %p173, %s174, %s175
      %p179 = pneg %p173
      %p180 = scmp.eq.s32.totalorder %s30, 1
      %p181 = por %p179, %p180
      %p182 = scmp.ne.s32.totalorder %s174, %s177
      %p183 = scmp.eq.s32.totalorder %s30, 0
      %p184 = por %p182, %p183
      %p185 = scmp.ne.s32.totalorder %s174, %s177
      %p186 = scmp.eq.s32.totalorder %s35, 1
      %p187 = por %p185, %p186
      %p188 = scmp.ne.s32.totalorder %s177, %s178
      %p189 = scmp.eq.s32.totalorder %s35, 0
      %p190 = por %p188, %p189
      %p191 = scmp.ne.s32.totalorder %s177, %s178
      %p192 = scmp.eq.s32.totalorder %s36, 1
      %p193 = por %p191, %p192
      %p195 = scmp.ne.s32.totalorder %s178, %s194
      %p196 = scmp.eq.s32.totalorder %s36, 0
      %p197 = por %p195, %p196
      %s198 = ssub.s32 %s38, %s45
      %p199 = scmp.eq.s32.totalorder %s198, 0
      %s201 = sadd.s32 %s200, 1
      %s202 = scalar_select %p199, %s200, %s201
      %p205 = pneg %p199
      %p206 = scmp.eq.s32.totalorder %s30, 1
      %p207 = por %p205, %p206
      %p208 = scmp.ne.s32.totalorder %s200, %s203
      %p209 = scmp.eq.s32.totalorder %s30, 0
      %p210 = por %p208, %p209
      %p211 = scmp.ne.s32.totalorder %s200, %s203
      %p212 = scmp.eq.s32.totalorder %s35, 1
      %p213 = por %p211, %p212
      %p214 = scmp.ne.s32.totalorder %s203, %s204
      %p215 = scmp.eq.s32.totalorder %s35, 0
      %p216 = por %p214, %p215
      %p217 = scmp.ne.s32.totalorder %s203, %s204
      %p218 = scmp.eq.s32.totalorder %s36, 1
      %p219 = por %p217, %p218
      %p221 = scmp.ne.s32.totalorder %s204, %s220
      %p222 = scmp.eq.s32.totalorder %s36, 0
      %p223 = por %p221, %p222
      %s224 = ssub.s32 %s38, %s45
      %p225 = scmp.eq.s32.totalorder %s224, 0
      %s227 = sadd.s32 %s226, 1
      %s228 = scalar_select %p225, %s226, %s227
      %p231 = pneg %p225
      %p232 = scmp.eq.s32.totalorder %s30, 1
      %p233 = por %p231, %p232
      %p234 = scmp.ne.s32.totalorder %s226, %s229
      %p235 = scmp.eq.s32.totalorder %s30, 0
      %p236 = por %p234, %p235
      %p237 = scmp.ne.s32.totalorder %s226, %s229
      %p238 = scmp.eq.s32.totalorder %s35, 1
      %p239 = por %p237, %p238
      %p240 = scmp.ne.s32.totalorder %s229, %s230
      %p241 = scmp.eq.s32.totalorder %s35, 0
      %p242 = por %p240, %p241
      %p243 = scmp.ne.s32.totalorder %s229, %s230
      %p244 = scmp.eq.s32.totalorder %s36, 1
      %p245 = por %p243, %p244
      %p247 = scmp.ne.s32.totalorder %s230, %s246
      %p248 = scmp.eq.s32.totalorder %s36, 0
      %p249 = por %p247, %p248
      %s250 = ssub.s32 %s38, %s45
      %p251 = scmp.eq.s32.totalorder %s250, 0
      %s253 = sadd.s32 %s252, 1
      %s254 = scalar_select %p251, %s252, %s253
      %p257 = pneg %p251
      %p258 = scmp.eq.s32.totalorder %s30, 1
      %p259 = por %p257, %p258
      %p260 = scmp.ne.s32.totalorder %s252, %s255
      %p261 = scmp.eq.s32.totalorder %s30, 0
      %p262 = por %p260, %p261
      %p263 = scmp.ne.s32.totalorder %s252, %s255
      %p264 = scmp.eq.s32.totalorder %s35, 1
      %p265 = por %p263, %p264
      %p266 = scmp.ne.s32.totalorder %s255, %s256
      %p267 = scmp.eq.s32.totalorder %s35, 0
      %p268 = por %p266, %p267
      %p269 = scmp.ne.s32.totalorder %s255, %s256
      %p270 = scmp.eq.s32.totalorder %s36, 1
      %p271 = por %p269, %p270
      %p273 = scmp.ne.s32.totalorder %s256, %s272
      %p274 = scmp.eq.s32.totalorder %s36, 0
      %p275 = por %p273, %p274
      %s277 = sadd.s32 %s276, 1
      %p280 = scmp.eq.s32.totalorder %s30, 1
      %p281 = scmp.ne.s32.totalorder %s276, %s278
      %p282 = scmp.eq.s32.totalorder %s30, 0
      %p283 = por %p281, %p282
      %p284 = scmp.ne.s32.totalorder %s276, %s278
      %p285 = scmp.eq.s32.totalorder %s35, 1
      %p286 = por %p284, %p285
      %p287 = scmp.ne.s32.totalorder %s278, %s279
      %p288 = scmp.eq.s32.totalorder %s35, 0
      %p289 = por %p287, %p288
      %p290 = scmp.ne.s32.totalorder %s278, %s279
      %p291 = scmp.eq.s32.totalorder %s36, 1
      %p292 = por %p290, %p291
      %p294 = scmp.ne.s32.totalorder %s279, %s293
      %p295 = scmp.eq.s32.totalorder %s36, 0
      %p296 = por %p294, %p295
      %s298 = sadd.s32 %s297, 1
      %p301 = scmp.eq.s32.totalorder %s30, 1
      %p302 = scmp.ne.s32.totalorder %s297, %s299
      %p303 = scmp.eq.s32.totalorder %s30, 0
      %p304 = por %p302, %p303
      %p305 = scmp.ne.s32.totalorder %s297, %s299
      %p306 = scmp.eq.s32.totalorder %s35, 1
      %p307 = por %p305, %p306
      %p308 = scmp.ne.s32.totalorder %s299, %s300
      %p309 = scmp.eq.s32.totalorder %s35, 0
      %p310 = por %p308, %p309
      %p311 = scmp.ne.s32.totalorder %s299, %s300
      %p312 = scmp.eq.s32.totalorder %s36, 1
      %p313 = por %p311, %p312
      %p315 = scmp.ne.s32.totalorder %s300, %s314
      %p316 = scmp.eq.s32.totalorder %s36, 0
      %p317 = por %p315, %p316
      %s319 = sadd.s32 %s318, 1
      %p322 = scmp.eq.s32.totalorder %s30, 1
      %p323 = scmp.ne.s32.totalorder %s318, %s320
      %p324 = scmp.eq.s32.totalorder %s30, 0
      %p325 = por %p323, %p324
      %p326 = scmp.ne.s32.totalorder %s318, %s320
      %p327 = scmp.eq.s32.totalorder %s35, 1
      %p328 = por %p326, %p327
      %p329 = scmp.ne.s32.totalorder %s320, %s321
      %p330 = scmp.eq.s32.totalorder %s35, 0
      %p331 = por %p329, %p330
      %p332 = scmp.ne.s32.totalorder %s320, %s321
      %p333 = scmp.eq.s32.totalorder %s36, 1
      %p334 = por %p332, %p333
      %p336 = scmp.ne.s32.totalorder %s321, %s335
      %p337 = scmp.eq.s32.totalorder %s36, 0
      %p338 = por %p336, %p337
      %s340 = sadd.s32 %s339, 1
      %p343 = scmp.eq.s32.totalorder %s30, 1
      %p344 = scmp.ne.s32.totalorder %s339, %s341
      %p345 = scmp.eq.s32.totalorder %s30, 0
      %p346 = por %p344, %p345
      %p347 = scmp.ne.s32.totalorder %s339, %s341
      %p348 = scmp.eq.s32.totalorder %s35, 1
      %p349 = por %p347, %p348
      %p350 = scmp.ne.s32.totalorder %s341, %s342
      %p351 = scmp.eq.s32.totalorder %s35, 0
      %p352 = por %p350, %p351
      %p353 = scmp.ne.s32.totalorder %s341, %s342
      %p354 = scmp.eq.s32.totalorder %s36, 1
      %p355 = por %p353, %p354
      %p357 = scmp.ne.s32.totalorder %s342, %s356
      %p358 = scmp.eq.s32.totalorder %s36, 0
      %p359 = por %p357, %p358
      %s360 = ssub.s32 %s37, %s49
      %p361 = scmp.eq.s32.totalorder %s360, 0
      %s363 = sadd.s32 %s362, 1
      %s364 = scalar_select %p361, %s362, %s363
      %p367 = pneg %p361
      %p368 = scmp.eq.s32.totalorder %s30, 1
      %p369 = por %p367, %p368
      %p370 = scmp.ne.s32.totalorder %s362, %s365
      %p371 = scmp.eq.s32.totalorder %s30, 0
      %p372 = por %p370, %p371
      %p373 = scmp.ne.s32.totalorder %s362, %s365
      %p374 = scmp.eq.s32.totalorder %s35, 1
      %p375 = por %p373, %p374
      %p376 = scmp.ne.s32.totalorder %s365, %s366
      %p377 = scmp.eq.s32.totalorder %s35, 0
      %p378 = por %p376, %p377
      %p379 = scmp.ne.s32.totalorder %s365, %s366
      %p380 = scmp.eq.s32.totalorder %s36, 1
      %p381 = por %p379, %p380
      %p383 = scmp.ne.s32.totalorder %s366, %s382
      %p384 = scmp.eq.s32.totalorder %s36, 0
      %p385 = por %p383, %p384
      %p386 = scmp.le.s32.totalorder 1, %s30
      %p387 = scmp.lt.s32.totalorder %s30, 3
      %p388 = pnand %p386, %p387
      %p389 = pneg %p388
      // Predicated region
      $region9: #{tpu_custom_call.1} parent=5 // pred_check
        _
      $region10: #{tpu_custom_call.1} parent=5 // pred_check_branch
        %391 = sbr.rel (%p388) target = $region12
      $region11: #{tpu_custom_call.1} parent=5 // pred_region
        %s392 = ssub.s32 %s30, 1
        // Predicated region
        $region13: #{tpu_custom_call.1} parent=11 // pred_check
          %p393 = pneg %p63
        $region14: #{tpu_custom_call.1} parent=11 // pred_check_branch
          %395 = sbr.rel (%p393) target = $region16
        $region15: #{tpu_custom_call.1} parent=11 // pred_region
          _
        $region16: #{tpu_custom_call.1} parent=11 // pred_fallthru
          _
        // Predicated region
        $region17: #{tpu_custom_call.1} parent=11 // pred_check
          %p396 = pneg %p84
        $region18: #{tpu_custom_call.1} parent=11 // pred_check_branch
          %398 = sbr.rel (%p396) target = $region20
        $region19: #{tpu_custom_call.1} parent=11 // pred_region
          _
        $region20: #{tpu_custom_call.1} parent=11 // pred_fallthru
          _
        // Predicated region
        $region21: #{tpu_custom_call.1} parent=11 // pred_check
          %p399 = pneg %p110
        $region22: #{tpu_custom_call.1} parent=11 // pred_check_branch
          %401 = sbr.rel (%p399) target = $region24
        $region23: #{tpu_custom_call.1} parent=11 // pred_region
          %s402 = smul.u32 2, %s39
          %p403 = scmp.lt.s32.totalorder %s402, 1
          %s404 = scalar_select %p403, %s402, 1
          %s405 = smul.addr %s404, 8
          %s406 = scalar_lea.vmem %s2, %s405
          %s407 = smul.u32 2, %s39
        $region24: #{tpu_custom_call.1} parent=11 // pred_fallthru
          _
        // Predicated region
        $region25: #{tpu_custom_call.1} parent=11 // pred_check
          %p408 = pneg %p136
        $region26: #{tpu_custom_call.1} parent=11 // pred_check_branch
          %410 = sbr.rel (%p408) target = $region28
        $region27: #{tpu_custom_call.1} parent=11 // pred_region
          %s411 = smul.u32 2, %s39
          %p412 = scmp.lt.s32.totalorder %s411, 1
          %s413 = scalar_select %p412, %s411, 1
          %s414 = smul.addr %s413, 8
          %s415 = scalar_lea.vmem %s3, %s414
          %s416 = smul.u32 2, %s39
        $region28: #{tpu_custom_call.1} parent=11 // pred_fallthru
          _
        // Predicated region
        $region29: #{tpu_custom_call.1} parent=11 // pred_check
          %p417 = pneg %p289
        $region30: #{tpu_custom_call.1} parent=11 // pred_check_branch
          %419 = sbr.rel (%p417) target = $region32
        $region31: #{tpu_custom_call.1} parent=11 // pred_region
          %421 = vsyncadd [#allocation9], 0
          %s422 = sshll.u32 %s9, 4
          %s423 = int_to_ptr.hbm [resolvable:$true] %s422
          %s424 = sshll.u32 [#allocation10], 4
          %s425 = int_to_ptr.vmem [resolvable:$true] %s424
          %430 = dma.hbm_to_vmem [thread:$0]  %s423, 2048, %s425, [#allocation9], 128, 128, 8
        $region32: #{tpu_custom_call.1} parent=11 // pred_fallthru
          _
        // Predicated region
        $region33: #{tpu_custom_call.1} parent=11 // pred_check
          %p431 = pneg %p310
        $region34: #{tpu_custom_call.1} parent=11 // pred_check_branch
          %433 = sbr.rel (%p431) target = $region36
        $region35: #{tpu_custom_call.1} parent=11 // pred_region
          _
        $region36: #{tpu_custom_call.1} parent=11 // pred_fallthru
          _
        // Predicated region
        $region37: #{tpu_custom_call.1} parent=11 // pred_check
          %p434 = pneg %p331
        $region38: #{tpu_custom_call.1} parent=11 // pred_check_branch
          %436 = sbr.rel (%p434) target = $region40
        $region39: #{tpu_custom_call.1} parent=11 // pred_region
          %438 = vsyncadd [#allocation12], 0
          %s439 = sshll.u32 %s11, 4
          %s440 = int_to_ptr.hbm [resolvable:$true] %s439
          %s441 = sshll.u32 [#allocation11], 4
          %s442 = int_to_ptr.vmem [resolvable:$true] %s441
          %447 = dma.hbm_to_vmem [thread:$0]  %s440, 2048, %s442, [#allocation12], 128, 128, 8
        $region40: #{tpu_custom_call.1} parent=11 // pred_fallthru
          _
        // Predicated region
        $region41: #{tpu_custom_call.1} parent=11 // pred_check
          %p448 = pneg %p352
        $region42: #{tpu_custom_call.1} parent=11 // pred_check_branch
          %450 = sbr.rel (%p448) target = $region44
        $region43: #{tpu_custom_call.1} parent=11 // pred_region
          _
        $region44: #{tpu_custom_call.1} parent=11 // pred_fallthru
          _
      $region12: #{tpu_custom_call.1} parent=5 // pred_fallthru
        _
      %p451 = scmp.lt.s32.totalorder %s30, 2
      // Predicated region
      $region45: #{tpu_custom_call.1} parent=5 // pred_check
        %p452 = pneg %p451
      $region46: #{tpu_custom_call.1} parent=5 // pred_check_branch
        %454 = sbr.rel (%p452) target = $region48
      $region47: #{tpu_custom_call.1} parent=5 // pred_region
        // Predicated region
        $region49: #{tpu_custom_call.1} parent=47 // pred_check
          %p455 = pneg %p158
        $region50: #{tpu_custom_call.1} parent=47 // pred_check_branch
          %457 = sbr.rel (%p455) target = $region52
        $region51: #{tpu_custom_call.1} parent=47 // pred_region
          %s458 = sand.u32 %s148, 1
          %s459 = scalar_lea.sflag [#allocation3], %s458
          %s460 = sand.u32 %s148, 1
          %s461 = smul.addr %s460, 8
          %s462 = scalar_lea.vmem [#allocation2], %s461
          %s463 = smul.u32 2, %s37
          %465 = vsyncadd %s459, 0
          %s466 = smul.addr %s38, 2
          %s467 = sadd.s32 %s463, %s466
          %s468 = smul.addr %s467, 4
          %s469 = scalar_lea.hbm %s4, %s468
          %s470 = sshll.u32 %s469, 4
          %s471 = int_to_ptr.hbm [resolvable:$true] %s470
          %s472 = sshll.u32 %s462, 4
          %s473 = int_to_ptr.vmem [resolvable:$true] %s472
          %478 = dma.hbm_to_vmem [thread:$0]  %s471, 128, %s473, %s459, 64, 64, 4
        $region52: #{tpu_custom_call.1} parent=47 // pred_fallthru
          _
        // Predicated region
        $region53: #{tpu_custom_call.1} parent=47 // pred_check
          %p479 = pneg %p184
        $region54: #{tpu_custom_call.1} parent=47 // pred_check_branch
          %481 = sbr.rel (%p479) target = $region56
        $region55: #{tpu_custom_call.1} parent=47 // pred_region
          %s482 = sand.u32 %s30, 1
          %s483 = scalar_lea.sflag [#allocation6], %s482
          %s484 = sand.u32 %s174, 1
          %s485 = smul.addr %s484, 8
          %s486 = scalar_lea.vmem [#allocation5], %s485
          %488 = vsyncadd %s483, 0
          %s489 = smul.addr %s38, 2
          %s490 = smul.addr %s489, 4
          %s491 = scalar_lea.hbm %s5, %s490
          %s492 = sshll.u32 %s491, 4
          %s493 = int_to_ptr.hbm [resolvable:$true] %s492
          %s494 = sshll.u32 %s486, 4
          %s495 = int_to_ptr.vmem [resolvable:$true] %s494
          %500 = dma.hbm_to_vmem [thread:$0]  %s493, 128, %s495, %s483, 64, 64, 4
        $region56: #{tpu_custom_call.1} parent=47 // pred_fallthru
          _
        // Predicated region
        $region57: #{tpu_custom_call.1} parent=47 // pred_check
          %p501 = pneg %p210
        $region58: #{tpu_custom_call.1} parent=47 // pred_check_branch
          %503 = sbr.rel (%p501) target = $region60
        $region59: #{tpu_custom_call.1} parent=47 // pred_region
          %s504 = sand.u32 %s30, 1
          %s505 = scalar_lea.sflag [#allocation6], %s504
          %s506 = sand.u32 %s200, 1
          %s507 = smul.addr %s506, 8
          %s508 = scalar_lea.vmem [#allocation7], %s507
          %510 = vsyncadd %s505, 0
          %s511 = smul.addr %s38, 2
          %s512 = smul.addr %s511, 4
          %s513 = scalar_lea.hbm %s6, %s512
          %s514 = sshll.u32 %s513, 4
          %s515 = int_to_ptr.hbm [resolvable:$true] %s514
          %s516 = sshll.u32 %s508, 4
          %s517 = int_to_ptr.vmem [resolvable:$true] %s516
          %522 = dma.hbm_to_vmem [thread:$0]  %s515, 128, %s517, %s505, 64, 64, 4
        $region60: #{tpu_custom_call.1} parent=47 // pred_fallthru
          _
        // Predicated region
        $region61: #{tpu_custom_call.1} parent=47 // pred_check
          %p523 = pneg %p236
        $region62: #{tpu_custom_call.1} parent=47 // pred_check_branch
          %525 = sbr.rel (%p523) target = $region64
        $region63: #{tpu_custom_call.1} parent=47 // pred_region
          %p526 = scmp.lt.s32.totalorder %s38, 1
          %s527 = scalar_select %p526, %s38, 1
          %s528 = smul.addr %s527, 2
          %s529 = smul.addr %s528, 8
          %s530 = scalar_lea.vmem %s7, %s529
        $region64: #{tpu_custom_call.1} parent=47 // pred_fallthru
          _
        // Predicated region
        $region65: #{tpu_custom_call.1} parent=47 // pred_check
          %p531 = pneg %p262
        $region66: #{tpu_custom_call.1} parent=47 // pred_check_branch
          %533 = sbr.rel (%p531) target = $region68
        $region67: #{tpu_custom_call.1} parent=47 // pred_region
          %s534 = sand.u32 %s30, 1
          %s535 = scalar_lea.sflag [#allocation9], %s534
          %s536 = sand.u32 %s252, 1
          %s537 = smul.addr %s536, 64
          %s538 = scalar_lea.vmem [#allocation8], %s537
          %540 = vsyncadd %s535, 0
          %s541 = smul.addr %s38, 16
          %s542 = smul.addr %s541, 4
          %s543 = scalar_lea.hbm %s8, %s542
          %s544 = sshll.u32 %s543, 4
          %s545 = int_to_ptr.hbm [resolvable:$true] %s544
          %s546 = sshll.u32 %s538, 4
          %s547 = int_to_ptr.vmem [resolvable:$true] %s546
          %552 = dma.hbm_to_vmem [thread:$0]  %s545, 1024, %s547, %s535, 64, 64, 4
        $region68: #{tpu_custom_call.1} parent=47 // pred_fallthru
          _
      $region48: #{tpu_custom_call.1} parent=5 // pred_fallthru
        _
      %p553 = scmp.le.s32.totalorder 1, %s30
      %p554 = scmp.lt.s32.totalorder %s30, 3
      %p555 = pnand %p553, %p554
      %p556 = pneg %p555
      // Predicated region
      $region69: #{tpu_custom_call.1} parent=5 // pred_check
        _
      $region70: #{tpu_custom_call.1} parent=5 // pred_check_branch
        %558 = sbr.rel (%p555) target = $region72
      $region71: #{tpu_custom_call.1} parent=5 // pred_region
        %s559 = ssub.s32 %s30, 1
        %s560 = sand.u32 %s151, 1
        %s561 = scalar_lea.sflag [#allocation3], %s560
        %s562 = sand.u32 %s151, 1
        %s563 = smul.addr %s562, 8
        %s564 = scalar_lea.vmem [#allocation2], %s563
        // Predicated region
        $region73: #{tpu_custom_call.1} parent=71 // pred_check
          %p565 = pneg %p164
        $region74: #{tpu_custom_call.1} parent=71 // pred_check_branch
          %567 = sbr.rel (%p565) target = $region76
        $region75: #{tpu_custom_call.1} parent=71 // pred_region
          %569 = dma.done %s561, 128
        $region76: #{tpu_custom_call.1} parent=71 // pred_fallthru
          _
        %s570 = sand.u32 %s35, 1
        %s571 = scalar_lea.sflag [#allocation6], %s570
        %s572 = sand.u32 %s177, 1
        %s573 = smul.addr %s572, 8
        %s574 = scalar_lea.vmem [#allocation5], %s573
        // Predicated region
        $region77: #{tpu_custom_call.1} parent=71 // pred_check
          %p575 = pneg %p190
        $region78: #{tpu_custom_call.1} parent=71 // pred_check_branch
          %577 = sbr.rel (%p575) target = $region80
        $region79: #{tpu_custom_call.1} parent=71 // pred_region
          %579 = dma.done %s571, 128
        $region80: #{tpu_custom_call.1} parent=71 // pred_fallthru
          _
        %s580 = sand.u32 %s35, 1
        %s581 = scalar_lea.sflag [#allocation6], %s580
        %s582 = sand.u32 %s203, 1
        %s583 = smul.addr %s582, 8
        %s584 = scalar_lea.vmem [#allocation7], %s583
        // Predicated region
        $region81: #{tpu_custom_call.1} parent=71 // pred_check
          %p585 = pneg %p216
        $region82: #{tpu_custom_call.1} parent=71 // pred_check_branch
          %587 = sbr.rel (%p585) target = $region84
        $region83: #{tpu_custom_call.1} parent=71 // pred_region
          %589 = dma.done %s581, 128
        $region84: #{tpu_custom_call.1} parent=71 // pred_fallthru
          _
        %s590 = sand.u32 %s35, 1
        %s591 = scalar_lea.sflag [#allocation9], %s590
        %s592 = sand.u32 %s255, 1
        %s593 = smul.addr %s592, 64
        %s594 = scalar_lea.vmem [#allocation8], %s593
        // Predicated region
        $region85: #{tpu_custom_call.1} parent=71 // pred_check
          %p595 = pneg %p268
        $region86: #{tpu_custom_call.1} parent=71 // pred_check_branch
          %597 = sbr.rel (%p595) target = $region88
        $region87: #{tpu_custom_call.1} parent=71 // pred_region
          %599 = dma.done %s591, 1024
        $region88: #{tpu_custom_call.1} parent=71 // pred_fallthru
          _
        // Predicated region
        $region89: #{tpu_custom_call.1} parent=71 // pred_check
          %p600 = pneg %p289
        $region90: #{tpu_custom_call.1} parent=71 // pred_check_branch
          %602 = sbr.rel (%p600) target = $region92
        $region91: #{tpu_custom_call.1} parent=71 // pred_region
          %604 = dma.done [#allocation9], 2048
        $region92: #{tpu_custom_call.1} parent=71 // pred_fallthru
          _
        // Predicated region
        $region93: #{tpu_custom_call.1} parent=71 // pred_check
          %p605 = pneg %p331
        $region94: #{tpu_custom_call.1} parent=71 // pred_check_branch
          %607 = sbr.rel (%p605) target = $region96
        $region95: #{tpu_custom_call.1} parent=71 // pred_region
          %609 = dma.done [#allocation12], 2048
        $region96: #{tpu_custom_call.1} parent=71 // pred_fallthru
          _
        %p610 = pneg %p63
        %p611 = pneg %p60
        %p612 = pneg %p84
        %p613 = pneg %p81
        %s614 = smul.u32 2, %s39
        %p615 = scmp.lt.s32.totalorder %s614, 1
        %s616 = scalar_select %p615, %s614, 1
        %s617 = smul.addr %s616, 8
        %s618 = scalar_lea.vmem %s2, %s617
        %p619 = pneg %p110
        %p620 = pneg %p107
        %s621 = smul.u32 2, %s39
        %p622 = scmp.lt.s32.totalorder %s621, 1
        %s623 = scalar_select %p622, %s621, 1
        %s624 = smul.addr %s623, 8
        %s625 = scalar_lea.vmem %s3, %s624
        %p626 = pneg %p136
        %p627 = pneg %p133
        %s628 = sand.u32 %s151, 1
        %s629 = scalar_lea.sflag [#allocation3], %s628
        %s630 = sand.u32 %s151, 1
        %s631 = smul.addr %s630, 8
        %s632 = scalar_lea.vmem [#allocation2], %s631
        %p633 = pneg %p164
        %p634 = pneg %p161
        %s635 = sand.u32 %s35, 1
        %s636 = scalar_lea.sflag [#allocation6], %s635
        %s637 = sand.u32 %s177, 1
        %s638 = smul.addr %s637, 8
        %s639 = scalar_lea.vmem [#allocation5], %s638
        %p640 = pneg %p190
        %p641 = pneg %p187
        %s642 = sand.u32 %s35, 1
        %s643 = scalar_lea.sflag [#allocation6], %s642
        %s644 = sand.u32 %s203, 1
        %s645 = smul.addr %s644, 8
        %s646 = scalar_lea.vmem [#allocation7], %s645
        %p647 = pneg %p216
        %p648 = pneg %p213
        %p649 = scmp.lt.s32.totalorder %s40, 1
        %s650 = scalar_select %p649, %s40, 1
        %s651 = smul.addr %s650, 2
        %s652 = smul.addr %s651, 8
        %s653 = scalar_lea.vmem %s7, %s652
        %p654 = pneg %p242
        %p655 = pneg %p239
        %s656 = sand.u32 %s35, 1
        %s657 = scalar_lea.sflag [#allocation9], %s656
        %s658 = sand.u32 %s255, 1
        %s659 = smul.addr %s658, 64
        %s660 = scalar_lea.vmem [#allocation8], %s659
        %p661 = pneg %p268
        %p662 = pneg %p265
        %p663 = pneg %p289
        %p664 = pneg %p286
        %p665 = pneg %p310
        %p666 = pneg %p307
        %p667 = pneg %p331
        %p668 = pneg %p328
        %p669 = pneg %p352
        %p670 = pneg %p349
        %p671 = pneg %p378
        %p672 = pneg %p375
        %s673 = smul.u32 2, %s39
        %p674 = scmp.lt.s32.totalorder %s673, 1
        %s675 = scalar_select %p674, %s673, 1
        %s676 = smul.addr %s675, 8
        %s677 = scalar_lea.vmem %s2, %s676
        %s678 = smul.u32 2, %s39
        %s679 = smul.u32 2, %s39
        %p680 = scmp.lt.s32.totalorder %s679, 1
        %s681 = scalar_select %p680, %s679, 1
        %s682 = smul.addr %s681, 8
        %s683 = scalar_lea.vmem %s3, %s682
        %s684 = smul.u32 2, %s39
        %s685 = smul.u32 2, %s39
        %p686 = scmp.lt.s32.totalorder %s40, 1
        %s687 = scalar_select %p686, %s40, 1
        %s688 = smul.addr %s687, 2
        %s689 = smul.addr %s688, 8
        %s690 = scalar_lea.vmem %s7, %s689
        %s691 = smul.u32 2, %s39
        %v693 = vld [vmem:[%s0] sm:$0xff]
        %v694 = vld [vmem:[%s0 + $0x8] sm:$0xff]
        %v695 = vld [vmem:[%s690] sm:$0xff]
        %v696 = vld [vmem:[%s690 + $0x8] sm:$0xff]
        %v697 = vadd.f32 %v693, %v695
        %v698 = vadd.f32 %v694, %v696
        %v699 = vld [vmem:[%s1] sm:$0xff]
        %v700 = vld [vmem:[%s1 + $0x8] sm:$0xff]
        %702 = vset.pattern.permute.xlu0 0
        %703 = vperm.xlu0 %702, %v699
        %v704 = vpop.permute.xlu0 %703
        %707 = vset.pattern.permute.xlu0 0
        %708 = vperm.xlu0 %707, %v700
        %v709 = vpop.permute.xlu0 %708
        %v711 = vmul.f32 %v697, %v704
        %v712 = vmul.f32 %v698, %v709
        %v713 = vpack.c.bf16 %v712, %v711
        %v714 = vld [vmem:[%s574] sm:$0xf]
        %v715 = vld [vmem:[%s574 + $0x4] sm:$0xf]
        %v716 = vld [vmem:[%s584] sm:$0xf]
        %v717 = vld [vmem:[%s584 + $0x4] sm:$0xf]
        %v718 = vld [vmem:[%s594] sm:$0xf]
        %v719 = vld [vmem:[%s594 + $0x4] sm:$0xf]
        %v720 = vld [vmem:[%s594 + $0x8] sm:$0xf]
        %v721 = vld [vmem:[%s594 + $0xc] sm:$0xf]
        %v722 = vld [vmem:[%s594 + $0x10] sm:$0xf]
        %v723 = vld [vmem:[%s594 + $0x14] sm:$0xf]
        %v724 = vld [vmem:[%s594 + $0x18] sm:$0xf]
        %v725 = vld [vmem:[%s594 + $0x1c] sm:$0xf]
        %v726 = vld [vmem:[%s594 + $0x20] sm:$0xf]
        %v727 = vld [vmem:[%s594 + $0x24] sm:$0xf]
        %v728 = vld [vmem:[%s594 + $0x28] sm:$0xf]
        %v729 = vld [vmem:[%s594 + $0x2c] sm:$0xf]
        %v730 = vld [vmem:[%s594 + $0x30] sm:$0xf]
        %v731 = vld [vmem:[%s594 + $0x34] sm:$0xf]
        %v732 = vld [vmem:[%s594 + $0x38] sm:$0xf]
        %v733 = vld [vmem:[%s594 + $0x3c] sm:$0xf]
        %v736 = vunpack.c.l.b16 %v716
        %v737 = vunpack.c.l.b16 %v717
        %v738 = vpack.c.b16 %v737, %v736
        %v756 = vunpack.c.l.b16 %v718
        %v757 = vunpack.c.l.b16 %v719
        %v758 = vunpack.c.l.b16 %v720
        %v759 = vunpack.c.l.b16 %v721
        %v760 = vunpack.c.l.b16 %v722
        %v761 = vunpack.c.l.b16 %v723
        %v762 = vunpack.c.l.b16 %v724
        %v763 = vunpack.c.l.b16 %v725
        %v764 = vunpack.c.l.b16 %v726
        %v765 = vunpack.c.l.b16 %v727
        %v766 = vunpack.c.l.b16 %v728
        %v767 = vunpack.c.l.b16 %v729
        %v768 = vunpack.c.l.b16 %v730
        %v769 = vunpack.c.l.b16 %v731
        %v770 = vunpack.c.l.b16 %v732
        %v771 = vunpack.c.l.b16 %v733
        %v772 = vpack.c.b16 %v757, %v756
        %v773 = vpack.c.b16 %v759, %v758
        %v774 = vpack.c.b16 %v761, %v760
        %v775 = vpack.c.b16 %v763, %v762
        %v776 = vpack.c.b16 %v765, %v764
        %v777 = vpack.c.b16 %v767, %v766
        %v778 = vpack.c.b16 %v769, %v768
        %v779 = vpack.c.b16 %v771, %v770
        %788 = vmatpush.bf16.msra.mxu0 %v779
        %789 = vmatpush.bf16.msra.mxu0 %v778
        %790 = vmatpush.bf16.msra.mxu0 %v777
        %791 = vmatpush.bf16.msra.mxu0 %v776
        %792 = vmatpush.bf16.msra.mxu0 %v775
        %793 = vmatpush.bf16.msra.mxu0 %v774
        %794 = vmatpush.bf16.msra.mxu0 %v773
        %795 = vmatpush.bf16.msra.mxu0 %v772
        %796 = vmatmul.bf16.gmra.mxu0 %v738
        %v797 = vpop.f32.mrf.mxu0
        %v798 = vadd.f32 0.0, %v797
        %v799 = vpop.f32.mrf.mxu0
        %v800 = vadd.f32 0.0, %v799
        %801 = vdwg.mxu0
        %v804 = vunpack.c.l.b16 %v714
        %v805 = vunpack.c.l.b16 %v715
        %v806 = vpack.c.b16 %v805, %v804
        %vm807 = vcmask 130048
        %v809 = vsel %vm807, %v806, 0
        %811 = vmatpush.bf16.msra.mxu0 0
        %812 = vmatpush.bf16.msra.mxu0 0
        %813 = vmatpush.bf16.msra.mxu0 0
        %814 = vmatpush.bf16.msra.mxu0 0
        %815 = vmatpush.bf16.msra.mxu0 0
        %816 = vmatpush.bf16.msra.mxu0 0
        %817 = vmatpush.bf16.msra.mxu0 0
        %818 = vmatpush.bf16.msra.mxu0 %v713
        %819 = vmatmul.bf16.gmra.mxu0 %v809
        %v820 = vpop.f32.mrf.mxu0
        %v821 = vadd.f32 %v798, %v820
        %v822 = vpop.f32.mrf.mxu0
        %v823 = vadd.f32 %v800, %v822
        %824 = vdwg.mxu0
        %v825 = vpack.c.bf16 %v823, %v821
        %v826 = vld [vmem:[%s564] sm:$0xf]
        %v827 = vld [vmem:[%s564 + $0x4] sm:$0xf]
        %v830 = vunpack.c.l.b16 %v826
        %v831 = vunpack.c.l.b16 %v827
        %v832 = vpack.c.b16 %v831, %v830
        %v834 = vsel %vm807, %v832, 0
        %836 = vmatpush.bf16.msra.mxu0 0
        %837 = vmatpush.bf16.msra.mxu0 0
        %838 = vmatpush.bf16.msra.mxu0 0
        %839 = vmatpush.bf16.msra.mxu0 0
        %840 = vmatpush.bf16.msra.mxu0 0
        %841 = vmatpush.bf16.msra.mxu0 0
        %842 = vmatpush.bf16.msra.mxu0 0
        %843 = vmatpush.bf16.msra.mxu0 %v825
        %844 = vmatmul.bf16.gmra.mxu0 %v834
        %v845 = vpop.f32.mrf.mxu0
        %v846 = vadd.f32 0.0, %v845
        %v847 = vpop.f32.mrf.mxu0
        %v848 = vadd.f32 0.0, %v847
        %849 = vdwg.mxu0
        %p850 = scmp.eq.s32.totalorder %s40, 0
        // Predicated region
        $region97: #{tpu_custom_call.1} parent=71 // pred_check
          %p851 = pneg %p850
        $region98: #{tpu_custom_call.1} parent=71 // pred_check_branch
          %853 = sbr.rel (%p851) target = $region100
        $region99: #{tpu_custom_call.1} parent=71 // pred_region
          %854 = vst [vmem:[#allocation13] sm:$0xff] 0.0
          %855 = vst [vmem:[#allocation13 + $0x8] sm:$0xff] 0.0
        $region100: #{tpu_custom_call.1} parent=71 // pred_fallthru
          _
        %v856 = vld [vmem:[#allocation13] sm:$0xff]
        %v857 = vld [vmem:[#allocation13 + $0x8] sm:$0xff]
        %v858 = vadd.f32 %v856, %v846
        %v859 = vadd.f32 %v857, %v848
        %860 = vst [vmem:[#allocation13] sm:$0xff] %v858
        %861 = vst [vmem:[#allocation13 + $0x8] sm:$0xff] %v859
        %p862 = scmp.eq.s32.totalorder %s40, 1
        // Predicated region
        $region101: #{tpu_custom_call.1} parent=71 // pred_check
          %p863 = pneg %p862
        $region102: #{tpu_custom_call.1} parent=71 // pred_check_branch
          %865 = sbr.rel (%p863) target = $region104
        $region103: #{tpu_custom_call.1} parent=71 // pred_region
          %v866 = vld [vmem:[#allocation13] sm:$0xff]
          %v867 = vld [vmem:[#allocation13 + $0x8] sm:$0xff]
          %v868 = vld [vmem:[%s677] sm:$0xff]
          %v869 = vld [vmem:[%s677 + $0x8] sm:$0xff]
          %871 = vset.pattern.permute.xlu0 0
          %872 = vperm.xlu0 %871, %v868
          %v873 = vpop.permute.xlu0 %872
          %876 = vset.pattern.permute.xlu0 0
          %877 = vperm.xlu0 %876, %v869
          %v878 = vpop.permute.xlu0 %877
          %v880 = vmul.f32 %v866, %v873
          %v881 = vmul.f32 %v867, %v878
          %v882 = vld [vmem:[#allocation10] sm:$0xff]
          %v883 = vld [vmem:[#allocation10 + $0x8] sm:$0xff]
          %v884 = vld [vmem:[#allocation10 + $0x10] sm:$0xff]
          %v885 = vld [vmem:[#allocation10 + $0x18] sm:$0xff]
          %v886 = vld [vmem:[#allocation10 + $0x20] sm:$0xff]
          %v887 = vld [vmem:[#allocation10 + $0x28] sm:$0xff]
          %v888 = vld [vmem:[#allocation10 + $0x30] sm:$0xff]
          %v889 = vld [vmem:[#allocation10 + $0x38] sm:$0xff]
          %v890 = vld [vmem:[#allocation10 + $0x40] sm:$0xff]
          %v891 = vld [vmem:[#allocation10 + $0x48] sm:$0xff]
          %v892 = vld [vmem:[#allocation10 + $0x50] sm:$0xff]
          %v893 = vld [vmem:[#allocation10 + $0x58] sm:$0xff]
          %v894 = vld [vmem:[#allocation10 + $0x60] sm:$0xff]
          %v895 = vld [vmem:[#allocation10 + $0x68] sm:$0xff]
          %v896 = vld [vmem:[#allocation10 + $0x70] sm:$0xff]
          %v897 = vld [vmem:[#allocation10 + $0x78] sm:$0xff]
          %v898 = vld [vmem:[%s10] sm:$0x1]
          %v900 = vperm.slane %v898, 0
          %902 = vmatpush.msra.mxu0 %v897
          %903 = vmatpush.msra.mxu0 %v896
          %904 = vmatpush.msra.mxu0 %v895
          %905 = vmatpush.msra.mxu0 %v894
          %906 = vmatpush.msra.mxu0 %v893
          %907 = vmatpush.msra.mxu0 %v892
          %908 = vmatpush.msra.mxu0 %v891
          %909 = vmatpush.msra.mxu0 %v890
          %910 = vmatpush.msra.mxu0 %v889
          %911 = vmatpush.msra.mxu0 %v888
          %912 = vmatpush.msra.mxu0 %v887
          %913 = vmatpush.msra.mxu0 %v886
          %914 = vmatpush.msra.mxu0 %v885
          %915 = vmatpush.msra.mxu0 %v884
          %916 = vmatpush.msra.mxu0 %v883
          %917 = vmatpush.msra.mxu0 %v882
          %918 = vmatmul.f32.gmra.mxu0 %v880
          %v919 = vpop.f32.mrf.mxu0
          %v920 = vadd.f32 %v900, %v919
          %921 = vmatmul.f32.gmra.mxu0 %v881
          %v922 = vpop.f32.mrf.mxu0
          %v923 = vadd.f32 %v900, %v922
          %924 = vdwg.mxu0
          %v925 = vld [vmem:[#allocation11] sm:$0xff]
          %v926 = vld [vmem:[#allocation11 + $0x8] sm:$0xff]
          %v927 = vld [vmem:[#allocation11 + $0x10] sm:$0xff]
          %v928 = vld [vmem:[#allocation11 + $0x18] sm:$0xff]
          %v929 = vld [vmem:[#allocation11 + $0x20] sm:$0xff]
          %v930 = vld [vmem:[#allocation11 + $0x28] sm:$0xff]
          %v931 = vld [vmem:[#allocation11 + $0x30] sm:$0xff]
          %v932 = vld [vmem:[#allocation11 + $0x38] sm:$0xff]
          %v933 = vld [vmem:[#allocation11 + $0x40] sm:$0xff]
          %v934 = vld [vmem:[#allocation11 + $0x48] sm:$0xff]
          %v935 = vld [vmem:[#allocation11 + $0x50] sm:$0xff]
          %v936 = vld [vmem:[#allocation11 + $0x58] sm:$0xff]
          %v937 = vld [vmem:[#allocation11 + $0x60] sm:$0xff]
          %v938 = vld [vmem:[#allocation11 + $0x68] sm:$0xff]
          %v939 = vld [vmem:[#allocation11 + $0x70] sm:$0xff]
          %v940 = vld [vmem:[#allocation11 + $0x78] sm:$0xff]
          %v941 = vld [vmem:[%s12] sm:$0x1]
          %v943 = vperm.slane %v941, 0
          %945 = vmatpush.msra.mxu0 %v940
          %946 = vmatpush.msra.mxu0 %v939
          %947 = vmatpush.msra.mxu0 %v938
          %948 = vmatpush.msra.mxu0 %v937
          %949 = vmatpush.msra.mxu0 %v936
          %950 = vmatpush.msra.mxu0 %v935
          %951 = vmatpush.msra.mxu0 %v934
          %952 = vmatpush.msra.mxu0 %v933
          %953 = vmatpush.msra.mxu0 %v932
          %954 = vmatpush.msra.mxu0 %v931
          %955 = vmatpush.msra.mxu0 %v930
          %956 = vmatpush.msra.mxu0 %v929
          %957 = vmatpush.msra.mxu0 %v928
          %958 = vmatpush.msra.mxu0 %v927
          %959 = vmatpush.msra.mxu0 %v926
          %960 = vmatpush.msra.mxu0 %v925
          %961 = vmatmul.f32.gmra.mxu0 %v880
          %v962 = vpop.f32.mrf.mxu0
          %v963 = vadd.f32 %v943, %v962
          %964 = vmatmul.f32.gmra.mxu0 %v881
          %v965 = vpop.f32.mrf.mxu0
          %v966 = vadd.f32 %v943, %v965
          %967 = vdwg.mxu0
          %v968 = vld [vmem:[%s683] sm:$0xff]
          %v969 = vld [vmem:[%s683 + $0x8] sm:$0xff]
          %971 = vset.pattern.permute.xlu0 0
          %972 = vperm.xlu0 %971, %v968
          %v973 = vpop.permute.xlu0 %972
          %976 = vset.pattern.permute.xlu0 0
          %977 = vperm.xlu0 %976, %v969
          %v978 = vpop.permute.xlu0 %977
          %v980 = vmul.f32 %v920, %v973
          %v981 = vmul.f32 %v923, %v978
          %v982 = vsub.f32 1.0, %v968
          %v983 = vsub.f32 1.0, %v969
          %985 = vset.pattern.permute.xlu0 0
          %986 = vperm.xlu0 %985, %v982
          %v987 = vpop.permute.xlu0 %986
          %990 = vset.pattern.permute.xlu0 0
          %991 = vperm.xlu0 %990, %v983
          %v992 = vpop.permute.xlu0 %991
          %v994 = vmul.f32 %v963, %v987
          %v995 = vmul.f32 %v966, %v992
          %v996 = vadd.f32 %v980, %v994
          %v997 = vadd.f32 %v981, %v995
          %998 = vst [vmem:[#allocation13] sm:$0xff] %v996
          %999 = vst [vmem:[#allocation13 + $0x8] sm:$0xff] %v997
        $region104: #{tpu_custom_call.1} parent=71 // pred_fallthru
          _
        // Predicated region
        $region105: #{tpu_custom_call.1} parent=71 // pred_check
          %p1000 = pneg %p375
        $region106: #{tpu_custom_call.1} parent=71 // pred_check_branch
          %1002 = sbr.rel (%p1000) target = $region108
        $region107: #{tpu_custom_call.1} parent=71 // pred_region
          %s1003 = smul.u32 2, %s39
          %1005 = vsyncadd [#allocation4], 0
          %s1006 = smul.addr %s1003, 8
          %s1007 = scalar_lea.hbm %s13, %s1006
          %s1008 = sshll.u32 [#allocation13], 4
          %s1009 = int_to_ptr.vmem [resolvable:$true] %s1008
          %s1010 = sshll.u32 %s1007, 4
          %s1011 = int_to_ptr.hbm [resolvable:$true] %s1010
          %1016 = dma.vmem_to_hbm [thread:$0]  %s1009, 256, %s1011, [#allocation4], 128, 128, 8
        $region108: #{tpu_custom_call.1} parent=71 // pred_fallthru
          _
        // Predicated region
        $region109: #{tpu_custom_call.1} parent=71 // pred_check
          %p1017 = pneg %p375
        $region110: #{tpu_custom_call.1} parent=71 // pred_check_branch
          %1019 = sbr.rel (%p1017) target = $region112
        $region111: #{tpu_custom_call.1} parent=71 // pred_region
          %1021 = dma.done [#allocation4], 256
        $region112: #{tpu_custom_call.1} parent=71 // pred_fallthru
          _
      $region72: #{tpu_custom_call.1} parent=5 // pred_fallthru
        _
      %p1022 = scmp.le.s32.totalorder 2, %s30
      // Predicated region
      $region113: #{tpu_custom_call.1} parent=5 // pred_check
        %p1023 = pneg %p1022
      $region114: #{tpu_custom_call.1} parent=5 // pred_check_branch
        %1025 = sbr.rel (%p1023) target = $region116
      $region115: #{tpu_custom_call.1} parent=5 // pred_region
        %s1026 = ssub.s32 %s30, 2
      $region116: #{tpu_custom_call.1} parent=5 // pred_fallthru
        _
    $region6: #{tpu_custom_call.1} parent=1 // loop_footer
      %s34 = sadd.s32 1, %s30
    $region7: #{tpu_custom_call.1} parent=1 // loop_footer_branch
      %29 = sbr.rel target = $region3
    $region8: #{tpu_custom_call.1} parent=1 // loop_exit
      _
    %1027 = vsyncpa [#allocation3], 1
    %s1028 = scalar_lea.sflag [#allocation3], 1
    %1029 = vsyncpa %s1028, 1
    %1030 = vsyncpa [#allocation6], 1
    %s1031 = scalar_lea.sflag [#allocation6], 1
    %1032 = vsyncpa %s1031, 1
    %1033 = vsyncpa [#allocation9], 1
    %s1034 = scalar_lea.sflag [#allocation9], 1
    %1035 = vsyncpa %s1034, 1
    %1036 = vsyncpa [#allocation12], 1
    %1037 = vsyncpa [#allocation4], 1
    %s1038 = scalar_lea.sflag [#allocation4], 1
    %1039 = vsyncpa %s1038, 1

</llo_original>
